<compile_context>
chip_gen: v6e
topology: v6e:2x2x1
jax: 0.10.0
libtpu: 0.0.40
codegen_flags: <defaults>
</compile_context>

<pallas_src>
import functools

import jax
import jax.numpy as jnp
from jax import lax
from jax.experimental import pallas as pl
from jax.experimental.pallas import tpu as pltpu

T = 5


def _time_rnn_kernel(x_ref, h0_ref, wx_ref, wh_ref, out_ref):
    # x_ref  : (B, T*I)  row b = [x_{b,0}, x_{b,1}, ..., x_{b,T-1}]  (free reshape of X)
    # h0_ref : (B, H)    initial hidden state
    # wx_ref : (H, I)    nn.Linear weight, applied as x @ Wx^T
    # wh_ref : (H, H)    nn.Linear weight, applied as h @ Wh^T
    # out_ref: (B, T*H)  out[:, t*H:(t+1)*H] = hidden state BEFORE step t
    B = x_ref.shape[0]
    H = wh_ref.shape[0]
    I = wx_ref.shape[1]
    Tlen = x_ref.shape[1] // I

    wx = wx_ref[...]                                   # (H, I), loop invariant
    wh = wh_ref[...]                                   # (H, H), loop invariant

    # Input projection, fused into the kernel and hoisted off the serial chain:
    # xp[t] = X[:, t, :] @ Wx^T.  Each dot is independent of h, so these can be
    # scheduled under the recurrence's MXU/EUP latency.
    xp = [
        lax.dot_general(
            x_ref[:, t * I:(t + 1) * I],               # (B, I), static lane slice
            wx,
            dimension_numbers=(((1,), (1,)), ((), ())),  # contract I with Wx's dim 1
            preferred_element_type=jnp.float32,
        )
        for t in range(Tlen)
    ]

    h = h0_ref[...].astype(jnp.float32)                # (B, H)

    # Fully-unrolled static loop over T (T=5).  Only h @ Wh^T + tanh is on the
    # serial dependency chain.
    for t in range(Tlen):
        out_ref[:, t * H:(t + 1) * H] = h.astype(out_ref.dtype)   # store PREVIOUS hidden
        h = jnp.tanh(
            xp[t]
            + lax.dot_general(
                h, wh,
                dimension_numbers=(((1,), (1,)), ((), ())),        # h @ Wh^T, no transpose op
                preferred_element_type=jnp.float32,
            )
        )


@functools.partial(jax.jit, static_argnames=("stateful",))
def time_rnn_forward(X, hs, Wx, Wh, *, stateful=False):
    """X: (batch, T, input), hs: (batch, hidden),
    Wx: (hidden, input), Wh: (hidden, hidden) -> (batch, T, hidden)."""
    B, Tlen, I = X.shape
    H = Wh.shape[0]

    h0 = (hs if stateful else jnp.zeros((B, H), dtype=jnp.float32)).astype(jnp.float32)

    # Free row-major reshape (metadata only) — the only wrapper-side "layout" op.
    x2d = X.astype(jnp.float32).reshape(B, Tlen * I)

    out_flat = pl.pallas_call(
        _time_rnn_kernel,
        out_shape=jax.ShapeDtypeStruct((B, Tlen * H), jnp.float32),
        in_specs=[
            pl.BlockSpec(memory_space=pltpu.MemorySpace.VMEM),  # X    (B, T*I)
            pl.BlockSpec(memory_space=pltpu.MemorySpace.VMEM),  # h0   (B, H)
            pl.BlockSpec(memory_space=pltpu.MemorySpace.VMEM),  # Wx   (H, I)
            pl.BlockSpec(memory_space=pltpu.MemorySpace.VMEM),  # Wh   (H, H)
        ],
        out_specs=pl.BlockSpec(memory_space=pltpu.MemorySpace.VMEM),
    )(x2d, h0, Wx.astype(jnp.float32), Wh.astype(jnp.float32))

    # Free row-major reshape back to (batch, T, hidden); no transpose.
    return out_flat.reshape(B, Tlen, H)


def _reference(X, hs, Wx, Wh, *, stateful=False):
    B, Tlen, _ = X.shape
    H = Wh.shape[0]
    h = hs if stateful else jnp.zeros((B, H), dtype=jnp.float32)
    outs = []
    for t in range(Tlen):
        outs.append(h)
        h = jnp.tanh(X[:, t, :] @ Wx.T + h @ Wh.T)
    return jnp.stack(outs, axis=1)


if __name__ == "__main__":
    key = jax.random.PRNGKey(0)
    k1, k2, k3, k4 = jax.random.split(key, 4)

    batch_size = 8
    input_size = 16
    hidden_size = 32

    X = jax.random.normal(k1, (batch_size, T, input_size), dtype=jnp.float32)
    hs = jax.random.normal(k2, (batch_size, hidden_size), dtype=jnp.float32)
    # nn.Linear weight shapes: Wx (hidden, input), Wh (hidden, hidden)
    Wx = jax.random.normal(k3, (hidden_size, input_size), dtype=jnp.float32) * 0.1
    Wh = jax.random.normal(k4, (hidden_size, hidden_size), dtype=jnp.float32) * 0.1

    # non-stateful path (module default)
    out = time_rnn_forward(X, hs, Wx, Wh, stateful=False)
    out = jax.block_until_ready(out)
    ref = _reference(X, hs, Wx, Wh, stateful=False)
    assert out.shape == (batch_size, T, hidden_size)
    assert jnp.allclose(out, ref, atol=1e-5, rtol=1e-5)

    # stateful path (uses provided hs as h_0)
    out_s = jax.block_until_ready(time_rnn_forward(X, hs, Wx, Wh, stateful=True))
    ref_s = _reference(X, hs, Wx, Wh, stateful=True)
    assert jnp.allclose(out_s, ref_s, atol=1e-5, rtol=1e-5)

    print("KERNEL_OK")
</pallas_src>

<mosaic_0001>
module attributes {stable_mosaic.version = 11 : i64} {
  func.func @_time_rnn_kernel(%arg0: memref<8x80xf32, #tpu.memory_space<vmem>>, %arg1: memref<8x32xf32, #tpu.memory_space<vmem>>, %arg2: memref<32x16xf32, #tpu.memory_space<vmem>>, %arg3: memref<32x32xf32, #tpu.memory_space<vmem>>, %arg4: memref<8x160xf32, #tpu.memory_space<vmem>>) attributes {dimension_semantics = [], scalar_prefetch = 0 : i64, scratch_operands = 0 : i64, tpu.core_type = #tpu.core_type<tc>} {
    %c0 = arith.constant 0 : index
    %c0_0 = arith.constant 0 : index
    %0 = vector.load %arg2[%c0, %c0_0] : memref<32x16xf32, #tpu.memory_space<vmem>>, vector<32x16xf32>
    %c0_1 = arith.constant 0 : index
    %c0_2 = arith.constant 0 : index
    %1 = vector.load %arg3[%c0_1, %c0_2] : memref<32x32xf32, #tpu.memory_space<vmem>>, vector<32x32xf32>
    %c0_3 = arith.constant 0 : index
    %c0_4 = arith.constant 0 : index
    %2 = vector.load %arg0[%c0_3, %c0_4] : memref<8x80xf32, #tpu.memory_space<vmem>>, vector<8x16xf32>
    %cst = arith.constant dense<0.000000e+00> : vector<8x32xf32>
    %3 = tpu.matmul %2, %0, %cst {dimension_numbers = #tpu.dot_dimension_numbers<[1], [1], [0], [0], [0, 0, 1, 0], [], []>} : vector<8x16xf32>, vector<32x16xf32>, vector<8x32xf32> -> vector<8x32xf32>
    %c0_5 = arith.constant 0 : index
    %c16 = arith.constant 16 : index
    %4 = vector.load %arg0[%c0_5, %c16] : memref<8x80xf32, #tpu.memory_space<vmem>>, vector<8x16xf32>
    %cst_6 = arith.constant dense<0.000000e+00> : vector<8x32xf32>
    %5 = tpu.matmul %4, %0, %cst_6 {dimension_numbers = #tpu.dot_dimension_numbers<[1], [1], [0], [0], [0, 0, 1, 0], [], []>} : vector<8x16xf32>, vector<32x16xf32>, vector<8x32xf32> -> vector<8x32xf32>
    %c0_7 = arith.constant 0 : index
    %c32 = arith.constant 32 : index
    %6 = vector.load %arg0[%c0_7, %c32] : memref<8x80xf32, #tpu.memory_space<vmem>>, vector<8x16xf32>
    %cst_8 = arith.constant dense<0.000000e+00> : vector<8x32xf32>
    %7 = tpu.matmul %6, %0, %cst_8 {dimension_numbers = #tpu.dot_dimension_numbers<[1], [1], [0], [0], [0, 0, 1, 0], [], []>} : vector<8x16xf32>, vector<32x16xf32>, vector<8x32xf32> -> vector<8x32xf32>
    %c0_9 = arith.constant 0 : index
    %c48 = arith.constant 48 : index
    %8 = vector.load %arg0[%c0_9, %c48] : memref<8x80xf32, #tpu.memory_space<vmem>>, vector<8x16xf32>
    %cst_10 = arith.constant dense<0.000000e+00> : vector<8x32xf32>
    %9 = tpu.matmul %8, %0, %cst_10 {dimension_numbers = #tpu.dot_dimension_numbers<[1], [1], [0], [0], [0, 0, 1, 0], [], []>} : vector<8x16xf32>, vector<32x16xf32>, vector<8x32xf32> -> vector<8x32xf32>
    %c0_11 = arith.constant 0 : index
    %c0_12 = arith.constant 0 : index
    %10 = vector.load %arg1[%c0_11, %c0_12] : memref<8x32xf32, #tpu.memory_space<vmem>>, vector<8x32xf32>
    %c0_13 = arith.constant 0 : index
    %c0_14 = arith.constant 0 : index
    %11 = vector.load %arg4[%c0_13, %c0_14] : memref<8x160xf32, #tpu.memory_space<vmem>>, vector<8x32xf32>
    tpu.vector_store %arg4[%c0_13, %c0_14], %10 {strides = array<i32>} : memref<8x160xf32, #tpu.memory_space<vmem>>, vector<8x32xf32>,
    %cst_15 = arith.constant dense<0.000000e+00> : vector<8x32xf32>
    %12 = tpu.matmul %10, %1, %cst_15 {dimension_numbers = #tpu.dot_dimension_numbers<[1], [1], [0], [0], [0, 0, 1, 0], [], []>} : vector<8x32xf32>, vector<32x32xf32>, vector<8x32xf32> -> vector<8x32xf32>
    %13 = arith.addf %3, %12 : vector<8x32xf32>
    %14 = math.tanh %13 : vector<8x32xf32>
    %c0_16 = arith.constant 0 : index
    %c32_17 = arith.constant 32 : index
    %15 = vector.load %arg4[%c0_16, %c32_17] : memref<8x160xf32, #tpu.memory_space<vmem>>, vector<8x32xf32>
    tpu.vector_store %arg4[%c0_16, %c32_17], %14 {strides = array<i32>} : memref<8x160xf32, #tpu.memory_space<vmem>>, vector<8x32xf32>,
    %cst_18 = arith.constant dense<0.000000e+00> : vector<8x32xf32>
    %16 = tpu.matmul %14, %1, %cst_18 {dimension_numbers = #tpu.dot_dimension_numbers<[1], [1], [0], [0], [0, 0, 1, 0], [], []>} : vector<8x32xf32>, vector<32x32xf32>, vector<8x32xf32> -> vector<8x32xf32>
    %17 = arith.addf %5, %16 : vector<8x32xf32>
    %18 = math.tanh %17 : vector<8x32xf32>
    %c0_19 = arith.constant 0 : index
    %c64 = arith.constant 64 : index
    %19 = vector.load %arg4[%c0_19, %c64] : memref<8x160xf32, #tpu.memory_space<vmem>>, vector<8x32xf32>
    tpu.vector_store %arg4[%c0_19, %c64], %18 {strides = array<i32>} : memref<8x160xf32, #tpu.memory_space<vmem>>, vector<8x32xf32>,
    %cst_20 = arith.constant dense<0.000000e+00> : vector<8x32xf32>
    %20 = tpu.matmul %18, %1, %cst_20 {dimension_numbers = #tpu.dot_dimension_numbers<[1], [1], [0], [0], [0, 0, 1, 0], [], []>} : vector<8x32xf32>, vector<32x32xf32>, vector<8x32xf32> -> vector<8x32xf32>
    %21 = arith.addf %7, %20 : vector<8x32xf32>
    %22 = math.tanh %21 : vector<8x32xf32>
    %c0_21 = arith.constant 0 : index
    %c96 = arith.constant 96 : index
    %23 = vector.load %arg4[%c0_21, %c96] : memref<8x160xf32, #tpu.memory_space<vmem>>, vector<8x32xf32>
    tpu.vector_store %arg4[%c0_21, %c96], %22 {strides = array<i32>} : memref<8x160xf32, #tpu.memory_space<vmem>>, vector<8x32xf32>,
    %cst_22 = arith.constant dense<0.000000e+00> : vector<8x32xf32>
    %24 = tpu.matmul %22, %1, %cst_22 {dimension_numbers = #tpu.dot_dimension_numbers<[1], [1], [0], [0], [0, 0, 1, 0], [], []>} : vector<8x32xf32>, vector<32x32xf32>, vector<8x32xf32> -> vector<8x32xf32>
    %25 = arith.addf %9, %24 : vector<8x32xf32>
    %26 = math.tanh %25 : vector<8x32xf32>
    %c0_23 = arith.constant 0 : index
    %c128 = arith.constant 128 : index
    %27 = vector.load %arg4[%c0_23, %c128] : memref<8x160xf32, #tpu.memory_space<vmem>>, vector<8x32xf32>
    tpu.vector_store %arg4[%c0_23, %c128], %26 {strides = array<i32>} : memref<8x160xf32, #tpu.memory_space<vmem>>, vector<8x32xf32>,
    return
  }
}

</mosaic_0001>

<llo_original>
// kernel: time_rnn_forward.1
$region0: #{time_rnn_forward.1}
  #allocation0 [shape = 'u32[]', space=smem, size = 0x4, offset = 0x4, fixed_abs, tag = 'smem constant byte address 0x4 - core index']
  #allocation1 [shape = 'u32[144,128]{1,0:T(1,128)}', space=vmem, size = 0x12000, scoped, tag = 'internal scratch']
  %s0 = inlined_call_operand.vmem [shape: f32[8,80], index: 0, kind: input, shape index: {}]
  %s1 = inlined_call_operand.vmem [shape: f32[8,32], index: 1, kind: input, shape index: {}]
  %s2 = inlined_call_operand.vmem [shape: f32[32,16], index: 2, kind: input, shape index: {}]
  %s3 = inlined_call_operand.vmem [shape: f32[32,32], index: 3, kind: input, shape index: {}]
  %s4 = inlined_call_operand.vmem [shape: f32[8,160], index: 4, kind: output, shape index: {}]
  %s5 = sld [smem:[#allocation0]]
  $region26: #{time_rnn_forward.1} parent=0
    _
  %s7 = ssub.s32 1, %s5
  %s8 = scalar_select 0, %s7, %s5
  // Predicated region
  $region2: #{time_rnn_forward.1} parent=0 // pred_check
    _
  $region3: #{time_rnn_forward.1} parent=0 // pred_check_branch
    %10 = sbr.rel (0) target = $region5
  $region4: #{time_rnn_forward.1} parent=0 // pred_region
    _
  $region5: #{time_rnn_forward.1} parent=0 // pred_fallthru
    _
  // Predicated region
  $region6: #{time_rnn_forward.1} parent=0 // pred_check
    _
  $region7: #{time_rnn_forward.1} parent=0 // pred_check_branch
    %12 = sbr.rel (0) target = $region9
  $region8: #{time_rnn_forward.1} parent=0 // pred_region
    _
  $region9: #{time_rnn_forward.1} parent=0 // pred_fallthru
    _
  // Predicated region
  $region10: #{time_rnn_forward.1} parent=0 // pred_check
    _
  $region11: #{time_rnn_forward.1} parent=0 // pred_check_branch
    %14 = sbr.rel (0) target = $region13
  $region12: #{time_rnn_forward.1} parent=0 // pred_region
    _
  $region13: #{time_rnn_forward.1} parent=0 // pred_fallthru
    _
  // Predicated region
  $region14: #{time_rnn_forward.1} parent=0 // pred_check
    _
  $region15: #{time_rnn_forward.1} parent=0 // pred_check_branch
    %16 = sbr.rel (0) target = $region17
  $region16: #{time_rnn_forward.1} parent=0 // pred_region
    _
  $region17: #{time_rnn_forward.1} parent=0 // pred_fallthru
    _
  %v17 = vld [vmem:[%s2] sm:$0xff]
  %v18 = vld [vmem:[%s2 + $0x8] sm:$0xff]
  %v19 = vld [vmem:[%s2 + $0x10] sm:$0xff]
  %v20 = vld [vmem:[%s2 + $0x18] sm:$0xff]
  %v21 = vld [vmem:[%s3] sm:$0xff]
  %v22 = vld [vmem:[%s3 + $0x8] sm:$0xff]
  %v23 = vld [vmem:[%s3 + $0x10] sm:$0xff]
  %v24 = vld [vmem:[%s3 + $0x18] sm:$0xff]
  %v25 = vld [vmem:[%s0] sm:$0xff]
  %v26 = vld [vmem:[%s1] sm:$0xff]
  %vm27 = vcmask 261120
  %28 = vst.msk [vmem:[%s4] sm:$0xff] %vm27, %v26
  %v30 = vsel %vm27, %v26, 0
  %v33 = vsel %vm27, %v21, 0
  %v36 = vsel %vm27, %v22, 0
  %v39 = vsel %vm27, %v23, 0
  %v42 = vsel %vm27, %v24, 0
  %44 = vmatprep.subr.mxu0 0.0
  %45 = vmatpush1.xpose.msra.mxu0 0.0
  %46 = vmatprep.subr.mxu0 0.0
  %47 = vmatpush1.xpose.msra.mxu0 0.0
  %48 = vmatprep.subr.mxu0 0.0
  %49 = vmatpush1.xpose.msra.mxu0 0.0
  %50 = vmatprep.subr.mxu0 0.0
  %51 = vmatpush1.xpose.msra.mxu0 0.0
  %52 = vmatprep.subr.mxu0 0.0
  %53 = vmatpush1.xpose.msra.mxu0 0.0
  %54 = vmatprep.subr.mxu0 0.0
  %55 = vmatpush1.xpose.msra.mxu0 0.0
  %56 = vmatprep.subr.mxu0 0.0
  %57 = vmatpush1.xpose.msra.mxu0 0.0
  %58 = vmatprep.subr.mxu0 0.0
  %59 = vmatpush1.xpose.msra.mxu0 0.0
  %60 = vmatprep.subr.mxu0 0.0
  %61 = vmatpush1.xpose.msra.mxu0 0.0
  %62 = vmatprep.subr.mxu0 0.0
  %63 = vmatpush1.xpose.msra.mxu0 0.0
  %64 = vmatprep.subr.mxu0 0.0
  %65 = vmatpush1.xpose.msra.mxu0 0.0
  %66 = vmatprep.subr.mxu0 0.0
  %67 = vmatpush1.xpose.msra.mxu0 0.0
  %68 = vmatprep.subr.mxu0 0.0
  %69 = vmatpush1.xpose.msra.mxu0 %v42
  %70 = vmatprep.subr.mxu0 0.0
  %71 = vmatpush1.xpose.msra.mxu0 %v39
  %72 = vmatprep.subr.mxu0 0.0
  %73 = vmatpush1.xpose.msra.mxu0 %v36
  %74 = vmatprep.subr.mxu0 0.0
  %75 = vmatpush1.xpose.msra.mxu0 %v33
  %76 = vmatprep.subr.mxu0 0.0
  %77 = vmatpush2.xpose.msra.mxu0 0.0
  %78 = vmatprep.subr.mxu0 0.0
  %79 = vmatpush2.xpose.msra.mxu0 0.0
  %80 = vmatprep.subr.mxu0 0.0
  %81 = vmatpush2.xpose.msra.mxu0 0.0
  %82 = vmatprep.subr.mxu0 0.0
  %83 = vmatpush2.xpose.msra.mxu0 0.0
  %84 = vmatprep.subr.mxu0 0.0
  %85 = vmatpush2.xpose.msra.mxu0 0.0
  %86 = vmatprep.subr.mxu0 0.0
  %87 = vmatpush2.xpose.msra.mxu0 0.0
  %88 = vmatprep.subr.mxu0 0.0
  %89 = vmatpush2.xpose.msra.mxu0 0.0
  %90 = vmatprep.subr.mxu0 0.0
  %91 = vmatpush2.xpose.msra.mxu0 0.0
  %92 = vmatprep.subr.mxu0 0.0
  %93 = vmatpush2.xpose.msra.mxu0 0.0
  %94 = vmatprep.subr.mxu0 0.0
  %95 = vmatpush2.xpose.msra.mxu0 0.0
  %96 = vmatprep.subr.mxu0 0.0
  %97 = vmatpush2.xpose.msra.mxu0 0.0
  %98 = vmatprep.subr.mxu0 0.0
  %99 = vmatpush2.xpose.msra.mxu0 0.0
  %100 = vmatprep.subr.mxu0 0.0
  %101 = vmatpush2.xpose.msra.mxu0 0.0
  %102 = vmatprep.subr.mxu0 0.0
  %103 = vmatpush2.xpose.msra.mxu0 0.0
  %104 = vmatprep.subr.mxu0 0.0
  %105 = vmatpush2.xpose.msra.mxu0 0.0
  %106 = vmatprep.subr.mxu0 0.0
  %107 = vmatpush2.xpose.msra.mxu0 0.0
  %108 = vmatprep.mubr.f32.mxu0 0.0
  %109 = vmatmul.mubr.f32.gmra.mxu0 %v30
  %v110 = vpop.f32.mrf.mxu0
  %v111 = vadd.f32 0.0, %v110
  %v112 = vpop.f32.mrf.mxu0
  %113 = vdwg.mxu0
  %vm114 = vcmask 130048
  %v116 = vsel %vm114, %v25, 0
  %v119 = vsel %vm114, %v17, 0
  %v122 = vsel %vm114, %v18, 0
  %v125 = vsel %vm114, %v19, 0
  %v128 = vsel %vm114, %v20, 0
  %130 = vmatprep.subr.mxu0 0.0
  %131 = vmatpush1.xpose.msra.mxu0 0.0
  %132 = vmatprep.subr.mxu0 0.0
  %133 = vmatpush1.xpose.msra.mxu0 0.0
  %134 = vmatprep.subr.mxu0 0.0
  %135 = vmatpush1.xpose.msra.mxu0 0.0
  %136 = vmatprep.subr.mxu0 0.0
  %137 = vmatpush1.xpose.msra.mxu0 0.0
  %138 = vmatprep.subr.mxu0 0.0
  %139 = vmatpush1.xpose.msra.mxu0 0.0
  %140 = vmatprep.subr.mxu0 0.0
  %141 = vmatpush1.xpose.msra.mxu0 0.0
  %142 = vmatprep.subr.mxu0 0.0
  %143 = vmatpush1.xpose.msra.mxu0 0.0
  %144 = vmatprep.subr.mxu0 0.0
  %145 = vmatpush1.xpose.msra.mxu0 0.0
  %146 = vmatprep.subr.mxu0 0.0
  %147 = vmatpush1.xpose.msra.mxu0 0.0
  %148 = vmatprep.subr.mxu0 0.0
  %149 = vmatpush1.xpose.msra.mxu0 0.0
  %150 = vmatprep.subr.mxu0 0.0
  %151 = vmatpush1.xpose.msra.mxu0 0.0
  %152 = vmatprep.subr.mxu0 0.0
  %153 = vmatpush1.xpose.msra.mxu0 0.0
  %154 = vmatprep.subr.mxu0 0.0
  %155 = vmatpush1.xpose.msra.mxu0 %v128
  %156 = vmatprep.subr.mxu0 0.0
  %157 = vmatpush1.xpose.msra.mxu0 %v125
  %158 = vmatprep.subr.mxu0 0.0
  %159 = vmatpush1.xpose.msra.mxu0 %v122
  %160 = vmatprep.subr.mxu0 0.0
  %161 = vmatpush1.xpose.msra.mxu0 %v119
  %162 = vmatprep.subr.mxu0 0.0
  %163 = vmatpush2.xpose.msra.mxu0 0.0
  %164 = vmatprep.subr.mxu0 0.0
  %165 = vmatpush2.xpose.msra.mxu0 0.0
  %166 = vmatprep.subr.mxu0 0.0
  %167 = vmatpush2.xpose.msra.mxu0 0.0
  %168 = vmatprep.subr.mxu0 0.0
  %169 = vmatpush2.xpose.msra.mxu0 0.0
  %170 = vmatprep.subr.mxu0 0.0
  %171 = vmatpush2.xpose.msra.mxu0 0.0
  %172 = vmatprep.subr.mxu0 0.0
  %173 = vmatpush2.xpose.msra.mxu0 0.0
  %174 = vmatprep.subr.mxu0 0.0
  %175 = vmatpush2.xpose.msra.mxu0 0.0
  %176 = vmatprep.subr.mxu0 0.0
  %177 = vmatpush2.xpose.msra.mxu0 0.0
  %178 = vmatprep.subr.mxu0 0.0
  %179 = vmatpush2.xpose.msra.mxu0 0.0
  %180 = vmatprep.subr.mxu0 0.0
  %181 = vmatpush2.xpose.msra.mxu0 0.0
  %182 = vmatprep.subr.mxu0 0.0
  %183 = vmatpush2.xpose.msra.mxu0 0.0
  %184 = vmatprep.subr.mxu0 0.0
  %185 = vmatpush2.xpose.msra.mxu0 0.0
  %186 = vmatprep.subr.mxu0 0.0
  %187 = vmatpush2.xpose.msra.mxu0 0.0
  %188 = vmatprep.subr.mxu0 0.0
  %189 = vmatpush2.xpose.msra.mxu0 0.0
  %190 = vmatprep.subr.mxu0 0.0
  %191 = vmatpush2.xpose.msra.mxu0 0.0
  %192 = vmatprep.subr.mxu0 0.0
  %193 = vmatpush2.xpose.msra.mxu0 0.0
  %194 = vmatprep.mubr.f32.mxu0 0.0
  %195 = vmatmul.mubr.f32.gmra.mxu0 %v116
  %v196 = vpop.f32.mrf.mxu0
  %v197 = vadd.f32 %v111, %v196
  %v198 = vpop.f32.mrf.mxu0
  %199 = vdwg.mxu0
  %v200 = vtanh.pop %v197
  %202 = vrot.lane.b32.xlu0 %v200, 32
  %v203 = vpop.permute.xlu0 %202
  %vm205 = vcmask 523520
  %206 = vst.msk [vmem:[%s4] sm:$0xff] %vm205, %v203
  %v207 = vsel %vm27, %v200, 0
  %209 = vmatprep.subr.mxu0 0.0
  %210 = vmatpush1.xpose.msra.mxu0 0.0
  %211 = vmatprep.subr.mxu0 0.0
  %212 = vmatpush1.xpose.msra.mxu0 0.0
  %213 = vmatprep.subr.mxu0 0.0
  %214 = vmatpush1.xpose.msra.mxu0 0.0
  %215 = vmatprep.subr.mxu0 0.0
  %216 = vmatpush1.xpose.msra.mxu0 0.0
  %217 = vmatprep.subr.mxu0 0.0
  %218 = vmatpush1.xpose.msra.mxu0 0.0
  %219 = vmatprep.subr.mxu0 0.0
  %220 = vmatpush1.xpose.msra.mxu0 0.0
  %221 = vmatprep.subr.mxu0 0.0
  %222 = vmatpush1.xpose.msra.mxu0 0.0
  %223 = vmatprep.subr.mxu0 0.0
  %224 = vmatpush1.xpose.msra.mxu0 0.0
  %225 = vmatprep.subr.mxu0 0.0
  %226 = vmatpush1.xpose.msra.mxu0 0.0
  %227 = vmatprep.subr.mxu0 0.0
  %228 = vmatpush1.xpose.msra.mxu0 0.0
  %229 = vmatprep.subr.mxu0 0.0
  %230 = vmatpush1.xpose.msra.mxu0 0.0
  %231 = vmatprep.subr.mxu0 0.0
  %232 = vmatpush1.xpose.msra.mxu0 0.0
  %233 = vmatprep.subr.mxu0 0.0
  %234 = vmatpush1.xpose.msra.mxu0 %v42
  %235 = vmatprep.subr.mxu0 0.0
  %236 = vmatpush1.xpose.msra.mxu0 %v39
  %237 = vmatprep.subr.mxu0 0.0
  %238 = vmatpush1.xpose.msra.mxu0 %v36
  %239 = vmatprep.subr.mxu0 0.0
  %240 = vmatpush1.xpose.msra.mxu0 %v33
  %241 = vmatprep.subr.mxu0 0.0
  %242 = vmatpush2.xpose.msra.mxu0 0.0
  %243 = vmatprep.subr.mxu0 0.0
  %244 = vmatpush2.xpose.msra.mxu0 0.0
  %245 = vmatprep.subr.mxu0 0.0
  %246 = vmatpush2.xpose.msra.mxu0 0.0
  %247 = vmatprep.subr.mxu0 0.0
  %248 = vmatpush2.xpose.msra.mxu0 0.0
  %249 = vmatprep.subr.mxu0 0.0
  %250 = vmatpush2.xpose.msra.mxu0 0.0
  %251 = vmatprep.subr.mxu0 0.0
  %252 = vmatpush2.xpose.msra.mxu0 0.0
  %253 = vmatprep.subr.mxu0 0.0
  %254 = vmatpush2.xpose.msra.mxu0 0.0
  %255 = vmatprep.subr.mxu0 0.0
  %256 = vmatpush2.xpose.msra.mxu0 0.0
  %257 = vmatprep.subr.mxu0 0.0
  %258 = vmatpush2.xpose.msra.mxu0 0.0
  %259 = vmatprep.subr.mxu0 0.0
  %260 = vmatpush2.xpose.msra.mxu0 0.0
  %261 = vmatprep.subr.mxu0 0.0
  %262 = vmatpush2.xpose.msra.mxu0 0.0
  %263 = vmatprep.subr.mxu0 0.0
  %264 = vmatpush2.xpose.msra.mxu0 0.0
  %265 = vmatprep.subr.mxu0 0.0
  %266 = vmatpush2.xpose.msra.mxu0 0.0
  %267 = vmatprep.subr.mxu0 0.0
  %268 = vmatpush2.xpose.msra.mxu0 0.0
  %269 = vmatprep.subr.mxu0 0.0
  %270 = vmatpush2.xpose.msra.mxu0 0.0
  %271 = vmatprep.subr.mxu0 0.0
  %272 = vmatpush2.xpose.msra.mxu0 0.0
  %273 = vmatprep.mubr.f32.mxu0 0.0
  %274 = vmatmul.mubr.f32.gmra.mxu0 %v207
  %v275 = vpop.f32.mrf.mxu0
  %v276 = vadd.f32 0.0, %v275
  %v277 = vpop.f32.mrf.mxu0
  %278 = vdwg.mxu0
  %279 = vrot.lane.b32.xlu0 %v25, 112
  %v280 = vpop.permute.xlu0 %279
  %v281 = vsel %vm114, %v280, 0
  %283 = vmatprep.subr.mxu0 0.0
  %284 = vmatpush1.xpose.msra.mxu0 0.0
  %285 = vmatprep.subr.mxu0 0.0
  %286 = vmatpush1.xpose.msra.mxu0 0.0
  %287 = vmatprep.subr.mxu0 0.0
  %288 = vmatpush1.xpose.msra.mxu0 0.0
  %289 = vmatprep.subr.mxu0 0.0
  %290 = vmatpush1.xpose.msra.mxu0 0.0
  %291 = vmatprep.subr.mxu0 0.0
  %292 = vmatpush1.xpose.msra.mxu0 0.0
  %293 = vmatprep.subr.mxu0 0.0
  %294 = vmatpush1.xpose.msra.mxu0 0.0
  %295 = vmatprep.subr.mxu0 0.0
  %296 = vmatpush1.xpose.msra.mxu0 0.0
  %297 = vmatprep.subr.mxu0 0.0
  %298 = vmatpush1.xpose.msra.mxu0 0.0
  %299 = vmatprep.subr.mxu0 0.0
  %300 = vmatpush1.xpose.msra.mxu0 0.0
  %301 = vmatprep.subr.mxu0 0.0
  %302 = vmatpush1.xpose.msra.mxu0 0.0
  %303 = vmatprep.subr.mxu0 0.0
  %304 = vmatpush1.xpose.msra.mxu0 0.0
  %305 = vmatprep.subr.mxu0 0.0
  %306 = vmatpush1.xpose.msra.mxu0 0.0
  %307 = vmatprep.subr.mxu0 0.0
  %308 = vmatpush1.xpose.msra.mxu0 %v128
  %309 = vmatprep.subr.mxu0 0.0
  %310 = vmatpush1.xpose.msra.mxu0 %v125
  %311 = vmatprep.subr.mxu0 0.0
  %312 = vmatpush1.xpose.msra.mxu0 %v122
  %313 = vmatprep.subr.mxu0 0.0
  %314 = vmatpush1.xpose.msra.mxu0 %v119
  %315 = vmatprep.subr.mxu0 0.0
  %316 = vmatpush2.xpose.msra.mxu0 0.0
  %317 = vmatprep.subr.mxu0 0.0
  %318 = vmatpush2.xpose.msra.mxu0 0.0
  %319 = vmatprep.subr.mxu0 0.0
  %320 = vmatpush2.xpose.msra.mxu0 0.0
  %321 = vmatprep.subr.mxu0 0.0
  %322 = vmatpush2.xpose.msra.mxu0 0.0
  %323 = vmatprep.subr.mxu0 0.0
  %324 = vmatpush2.xpose.msra.mxu0 0.0
  %325 = vmatprep.subr.mxu0 0.0
  %326 = vmatpush2.xpose.msra.mxu0 0.0
  %327 = vmatprep.subr.mxu0 0.0
  %328 = vmatpush2.xpose.msra.mxu0 0.0
  %329 = vmatprep.subr.mxu0 0.0
  %330 = vmatpush2.xpose.msra.mxu0 0.0
  %331 = vmatprep.subr.mxu0 0.0
  %332 = vmatpush2.xpose.msra.mxu0 0.0
  %333 = vmatprep.subr.mxu0 0.0
  %334 = vmatpush2.xpose.msra.mxu0 0.0
  %335 = vmatprep.subr.mxu0 0.0
  %336 = vmatpush2.xpose.msra.mxu0 0.0
  %337 = vmatprep.subr.mxu0 0.0
  %338 = vmatpush2.xpose.msra.mxu0 0.0
  %339 = vmatprep.subr.mxu0 0.0
  %340 = vmatpush2.xpose.msra.mxu0 0.0
  %341 = vmatprep.subr.mxu0 0.0
  %342 = vmatpush2.xpose.msra.mxu0 0.0
  %343 = vmatprep.subr.mxu0 0.0
  %344 = vmatpush2.xpose.msra.mxu0 0.0
  %345 = vmatprep.subr.mxu0 0.0
  %346 = vmatpush2.xpose.msra.mxu0 0.0
  %347 = vmatprep.mubr.f32.mxu0 0.0
  %348 = vmatmul.mubr.f32.gmra.mxu0 %v281
  %v349 = vpop.f32.mrf.mxu0
  %v350 = vadd.f32 %v276, %v349
  %v351 = vpop.f32.mrf.mxu0
  %352 = vdwg.mxu0
  %v353 = vtanh.pop %v350
  %355 = vrot.lane.b32.xlu0 %v353, 64
  %v356 = vpop.permute.xlu0 %355
  %vm358 = vcmask 785920
  %359 = vst.msk [vmem:[%s4] sm:$0xff] %vm358, %v356
  %v360 = vsel %vm27, %v353, 0
  %362 = vmatprep.subr.mxu0 0.0
  %363 = vmatpush1.xpose.msra.mxu0 0.0
  %364 = vmatprep.subr.mxu0 0.0
  %365 = vmatpush1.xpose.msra.mxu0 0.0
  %366 = vmatprep.subr.mxu0 0.0
  %367 = vmatpush1.xpose.msra.mxu0 0.0
  %368 = vmatprep.subr.mxu0 0.0
  %369 = vmatpush1.xpose.msra.mxu0 0.0
  %370 = vmatprep.subr.mxu0 0.0
  %371 = vmatpush1.xpose.msra.mxu0 0.0
  %372 = vmatprep.subr.mxu0 0.0
  %373 = vmatpush1.xpose.msra.mxu0 0.0
  %374 = vmatprep.subr.mxu0 0.0
  %375 = vmatpush1.xpose.msra.mxu0 0.0
  %376 = vmatprep.subr.mxu0 0.0
  %377 = vmatpush1.xpose.msra.mxu0 0.0
  %378 = vmatprep.subr.mxu0 0.0
  %379 = vmatpush1.xpose.msra.mxu0 0.0
  %380 = vmatprep.subr.mxu0 0.0
  %381 = vmatpush1.xpose.msra.mxu0 0.0
  %382 = vmatprep.subr.mxu0 0.0
  %383 = vmatpush1.xpose.msra.mxu0 0.0
  %384 = vmatprep.subr.mxu0 0.0
  %385 = vmatpush1.xpose.msra.mxu0 0.0
  %386 = vmatprep.subr.mxu0 0.0
  %387 = vmatpush1.xpose.msra.mxu0 %v42
  %388 = vmatprep.subr.mxu0 0.0
  %389 = vmatpush1.xpose.msra.mxu0 %v39
  %390 = vmatprep.subr.mxu0 0.0
  %391 = vmatpush1.xpose.msra.mxu0 %v36
  %392 = vmatprep.subr.mxu0 0.0
  %393 = vmatpush1.xpose.msra.mxu0 %v33
  %394 = vmatprep.subr.mxu0 0.0
  %395 = vmatpush2.xpose.msra.mxu0 0.0
  %396 = vmatprep.subr.mxu0 0.0
  %397 = vmatpush2.xpose.msra.mxu0 0.0
  %398 = vmatprep.subr.mxu0 0.0
  %399 = vmatpush2.xpose.msra.mxu0 0.0
  %400 = vmatprep.subr.mxu0 0.0
  %401 = vmatpush2.xpose.msra.mxu0 0.0
  %402 = vmatprep.subr.mxu0 0.0
  %403 = vmatpush2.xpose.msra.mxu0 0.0
  %404 = vmatprep.subr.mxu0 0.0
  %405 = vmatpush2.xpose.msra.mxu0 0.0
  %406 = vmatprep.subr.mxu0 0.0
  %407 = vmatpush2.xpose.msra.mxu0 0.0
  %408 = vmatprep.subr.mxu0 0.0
  %409 = vmatpush2.xpose.msra.mxu0 0.0
  %410 = vmatprep.subr.mxu0 0.0
  %411 = vmatpush2.xpose.msra.mxu0 0.0
  %412 = vmatprep.subr.mxu0 0.0
  %413 = vmatpush2.xpose.msra.mxu0 0.0
  %414 = vmatprep.subr.mxu0 0.0
  %415 = vmatpush2.xpose.msra.mxu0 0.0
  %416 = vmatprep.subr.mxu0 0.0
  %417 = vmatpush2.xpose.msra.mxu0 0.0
  %418 = vmatprep.subr.mxu0 0.0
  %419 = vmatpush2.xpose.msra.mxu0 0.0
  %420 = vmatprep.subr.mxu0 0.0
  %421 = vmatpush2.xpose.msra.mxu0 0.0
  %422 = vmatprep.subr.mxu0 0.0
  %423 = vmatpush2.xpose.msra.mxu0 0.0
  %424 = vmatprep.subr.mxu0 0.0
  %425 = vmatpush2.xpose.msra.mxu0 0.0
  %426 = vmatprep.mubr.f32.mxu0 0.0
  %427 = vmatmul.mubr.f32.gmra.mxu0 %v360
  %v428 = vpop.f32.mrf.mxu0
  %v429 = vadd.f32 0.0, %v428
  %v430 = vpop.f32.mrf.mxu0
  %431 = vdwg.mxu0
  %432 = vrot.lane.b32.xlu0 %v25, 96
  %v433 = vpop.permute.xlu0 %432
  %v434 = vsel %vm114, %v433, 0
  %436 = vmatprep.subr.mxu0 0.0
  %437 = vmatpush1.xpose.msra.mxu0 0.0
  %438 = vmatprep.subr.mxu0 0.0
  %439 = vmatpush1.xpose.msra.mxu0 0.0
  %440 = vmatprep.subr.mxu0 0.0
  %441 = vmatpush1.xpose.msra.mxu0 0.0
  %442 = vmatprep.subr.mxu0 0.0
  %443 = vmatpush1.xpose.msra.mxu0 0.0
  %444 = vmatprep.subr.mxu0 0.0
  %445 = vmatpush1.xpose.msra.mxu0 0.0
  %446 = vmatprep.subr.mxu0 0.0
  %447 = vmatpush1.xpose.msra.mxu0 0.0
  %448 = vmatprep.subr.mxu0 0.0
  %449 = vmatpush1.xpose.msra.mxu0 0.0
  %450 = vmatprep.subr.mxu0 0.0
  %451 = vmatpush1.xpose.msra.mxu0 0.0
  %452 = vmatprep.subr.mxu0 0.0
  %453 = vmatpush1.xpose.msra.mxu0 0.0
  %454 = vmatprep.subr.mxu0 0.0
  %455 = vmatpush1.xpose.msra.mxu0 0.0
  %456 = vmatprep.subr.mxu0 0.0
  %457 = vmatpush1.xpose.msra.mxu0 0.0
  %458 = vmatprep.subr.mxu0 0.0
  %459 = vmatpush1.xpose.msra.mxu0 0.0
  %460 = vmatprep.subr.mxu0 0.0
  %461 = vmatpush1.xpose.msra.mxu0 %v128
  %462 = vmatprep.subr.mxu0 0.0
  %463 = vmatpush1.xpose.msra.mxu0 %v125
  %464 = vmatprep.subr.mxu0 0.0
  %465 = vmatpush1.xpose.msra.mxu0 %v122
  %466 = vmatprep.subr.mxu0 0.0
  %467 = vmatpush1.xpose.msra.mxu0 %v119
  %468 = vmatprep.subr.mxu0 0.0
  %469 = vmatpush2.xpose.msra.mxu0 0.0
  %470 = vmatprep.subr.mxu0 0.0
  %471 = vmatpush2.xpose.msra.mxu0 0.0
  %472 = vmatprep.subr.mxu0 0.0
  %473 = vmatpush2.xpose.msra.mxu0 0.0
  %474 = vmatprep.subr.mxu0 0.0
  %475 = vmatpush2.xpose.msra.mxu0 0.0
  %476 = vmatprep.subr.mxu0 0.0
  %477 = vmatpush2.xpose.msra.mxu0 0.0
  %478 = vmatprep.subr.mxu0 0.0
  %479 = vmatpush2.xpose.msra.mxu0 0.0
  %480 = vmatprep.subr.mxu0 0.0
  %481 = vmatpush2.xpose.msra.mxu0 0.0
  %482 = vmatprep.subr.mxu0 0.0
  %483 = vmatpush2.xpose.msra.mxu0 0.0
  %484 = vmatprep.subr.mxu0 0.0
  %485 = vmatpush2.xpose.msra.mxu0 0.0
  %486 = vmatprep.subr.mxu0 0.0
  %487 = vmatpush2.xpose.msra.mxu0 0.0
  %488 = vmatprep.subr.mxu0 0.0
  %489 = vmatpush2.xpose.msra.mxu0 0.0
  %490 = vmatprep.subr.mxu0 0.0
  %491 = vmatpush2.xpose.msra.mxu0 0.0
  %492 = vmatprep.subr.mxu0 0.0
  %493 = vmatpush2.xpose.msra.mxu0 0.0
  %494 = vmatprep.subr.mxu0 0.0
  %495 = vmatpush2.xpose.msra.mxu0 0.0
  %496 = vmatprep.subr.mxu0 0.0
  %497 = vmatpush2.xpose.msra.mxu0 0.0
  %498 = vmatprep.subr.mxu0 0.0
  %499 = vmatpush2.xpose.msra.mxu0 0.0
  %500 = vmatprep.mubr.f32.mxu0 0.0
  %501 = vmatmul.mubr.f32.gmra.mxu0 %v434
  %v502 = vpop.f32.mrf.mxu0
  %v503 = vadd.f32 %v429, %v502
  %v504 = vpop.f32.mrf.mxu0
  %505 = vdwg.mxu0
  %v506 = vtanh.pop %v503
  %508 = vrot.lane.b32.xlu0 %v506, 96
  %v509 = vpop.permute.xlu0 %508
  %vm511 = vcmask 1048320
  %512 = vst.msk [vmem:[%s4] sm:$0xff] %vm511, %v509
  %v513 = vsel %vm27, %v506, 0
  %515 = vmatprep.subr.mxu0 0.0
  %516 = vmatpush1.xpose.msra.mxu0 0.0
  %517 = vmatprep.subr.mxu0 0.0
  %518 = vmatpush1.xpose.msra.mxu0 0.0
  %519 = vmatprep.subr.mxu0 0.0
  %520 = vmatpush1.xpose.msra.mxu0 0.0
  %521 = vmatprep.subr.mxu0 0.0
  %522 = vmatpush1.xpose.msra.mxu0 0.0
  %523 = vmatprep.subr.mxu0 0.0
  %524 = vmatpush1.xpose.msra.mxu0 0.0
  %525 = vmatprep.subr.mxu0 0.0
  %526 = vmatpush1.xpose.msra.mxu0 0.0
  %527 = vmatprep.subr.mxu0 0.0
  %528 = vmatpush1.xpose.msra.mxu0 0.0
  %529 = vmatprep.subr.mxu0 0.0
  %530 = vmatpush1.xpose.msra.mxu0 0.0
  %531 = vmatprep.subr.mxu0 0.0
  %532 = vmatpush1.xpose.msra.mxu0 0.0
  %533 = vmatprep.subr.mxu0 0.0
  %534 = vmatpush1.xpose.msra.mxu0 0.0
  %535 = vmatprep.subr.mxu0 0.0
  %536 = vmatpush1.xpose.msra.mxu0 0.0
  %537 = vmatprep.subr.mxu0 0.0
  %538 = vmatpush1.xpose.msra.mxu0 0.0
  %539 = vmatprep.subr.mxu0 0.0
  %540 = vmatpush1.xpose.msra.mxu0 %v42
  %541 = vmatprep.subr.mxu0 0.0
  %542 = vmatpush1.xpose.msra.mxu0 %v39
  %543 = vmatprep.subr.mxu0 0.0
  %544 = vmatpush1.xpose.msra.mxu0 %v36
  %545 = vmatprep.subr.mxu0 0.0
  %546 = vmatpush1.xpose.msra.mxu0 %v33
  %547 = vmatprep.subr.mxu0 0.0
  %548 = vmatpush2.xpose.msra.mxu0 0.0
  %549 = vmatprep.subr.mxu0 0.0
  %550 = vmatpush2.xpose.msra.mxu0 0.0
  %551 = vmatprep.subr.mxu0 0.0
  %552 = vmatpush2.xpose.msra.mxu0 0.0
  %553 = vmatprep.subr.mxu0 0.0
  %554 = vmatpush2.xpose.msra.mxu0 0.0
  %555 = vmatprep.subr.mxu0 0.0
  %556 = vmatpush2.xpose.msra.mxu0 0.0
  %557 = vmatprep.subr.mxu0 0.0
  %558 = vmatpush2.xpose.msra.mxu0 0.0
  %559 = vmatprep.subr.mxu0 0.0
  %560 = vmatpush2.xpose.msra.mxu0 0.0
  %561 = vmatprep.subr.mxu0 0.0
  %562 = vmatpush2.xpose.msra.mxu0 0.0
  %563 = vmatprep.subr.mxu0 0.0
  %564 = vmatpush2.xpose.msra.mxu0 0.0
  %565 = vmatprep.subr.mxu0 0.0
  %566 = vmatpush2.xpose.msra.mxu0 0.0
  %567 = vmatprep.subr.mxu0 0.0
  %568 = vmatpush2.xpose.msra.mxu0 0.0
  %569 = vmatprep.subr.mxu0 0.0
  %570 = vmatpush2.xpose.msra.mxu0 0.0
  %571 = vmatprep.subr.mxu0 0.0
  %572 = vmatpush2.xpose.msra.mxu0 0.0
  %573 = vmatprep.subr.mxu0 0.0
  %574 = vmatpush2.xpose.msra.mxu0 0.0
  %575 = vmatprep.subr.mxu0 0.0
  %576 = vmatpush2.xpose.msra.mxu0 0.0
  %577 = vmatprep.subr.mxu0 0.0
  %578 = vmatpush2.xpose.msra.mxu0 0.0
  %579 = vmatprep.mubr.f32.mxu0 0.0
  %580 = vmatmul.mubr.f32.gmra.mxu0 %v513
  %v581 = vpop.f32.mrf.mxu0
  %v582 = vadd.f32 0.0, %v581
  %v583 = vpop.f32.mrf.mxu0
  %584 = vdwg.mxu0
  %585 = vrot.lane.b32.xlu0 %v25, 80
  %v586 = vpop.permute.xlu0 %585
  %v587 = vsel %vm114, %v586, 0
  %589 = vmatprep.subr.mxu0 0.0
  %590 = vmatpush1.xpose.msra.mxu0 0.0
  %591 = vmatprep.subr.mxu0 0.0
  %592 = vmatpush1.xpose.msra.mxu0 0.0
  %593 = vmatprep.subr.mxu0 0.0
  %594 = vmatpush1.xpose.msra.mxu0 0.0
  %595 = vmatprep.subr.mxu0 0.0
  %596 = vmatpush1.xpose.msra.mxu0 0.0
  %597 = vmatprep.subr.mxu0 0.0
  %598 = vmatpush1.xpose.msra.mxu0 0.0
  %599 = vmatprep.subr.mxu0 0.0
  %600 = vmatpush1.xpose.msra.mxu0 0.0
  %601 = vmatprep.subr.mxu0 0.0
  %602 = vmatpush1.xpose.msra.mxu0 0.0
  %603 = vmatprep.subr.mxu0 0.0
  %604 = vmatpush1.xpose.msra.mxu0 0.0
  %605 = vmatprep.subr.mxu0 0.0
  %606 = vmatpush1.xpose.msra.mxu0 0.0
  %607 = vmatprep.subr.mxu0 0.0
  %608 = vmatpush1.xpose.msra.mxu0 0.0
  %609 = vmatprep.subr.mxu0 0.0
  %610 = vmatpush1.xpose.msra.mxu0 0.0
  %611 = vmatprep.subr.mxu0 0.0
  %612 = vmatpush1.xpose.msra.mxu0 0.0
  %613 = vmatprep.subr.mxu0 0.0
  %614 = vmatpush1.xpose.msra.mxu0 %v128
  %615 = vmatprep.subr.mxu0 0.0
  %616 = vmatpush1.xpose.msra.mxu0 %v125
  %617 = vmatprep.subr.mxu0 0.0
  %618 = vmatpush1.xpose.msra.mxu0 %v122
  %619 = vmatprep.subr.mxu0 0.0
  %620 = vmatpush1.xpose.msra.mxu0 %v119
  %621 = vmatprep.subr.mxu0 0.0
  %622 = vmatpush2.xpose.msra.mxu0 0.0
  %623 = vmatprep.subr.mxu0 0.0
  %624 = vmatpush2.xpose.msra.mxu0 0.0
  %625 = vmatprep.subr.mxu0 0.0
  %626 = vmatpush2.xpose.msra.mxu0 0.0
  %627 = vmatprep.subr.mxu0 0.0
  %628 = vmatpush2.xpose.msra.mxu0 0.0
  %629 = vmatprep.subr.mxu0 0.0
  %630 = vmatpush2.xpose.msra.mxu0 0.0
  %631 = vmatprep.subr.mxu0 0.0
  %632 = vmatpush2.xpose.msra.mxu0 0.0
  %633 = vmatprep.subr.mxu0 0.0
  %634 = vmatpush2.xpose.msra.mxu0 0.0
  %635 = vmatprep.subr.mxu0 0.0
  %636 = vmatpush2.xpose.msra.mxu0 0.0
  %637 = vmatprep.subr.mxu0 0.0
  %638 = vmatpush2.xpose.msra.mxu0 0.0
  %639 = vmatprep.subr.mxu0 0.0
  %640 = vmatpush2.xpose.msra.mxu0 0.0
  %641 = vmatprep.subr.mxu0 0.0
  %642 = vmatpush2.xpose.msra.mxu0 0.0
  %643 = vmatprep.subr.mxu0 0.0
  %644 = vmatpush2.xpose.msra.mxu0 0.0
  %645 = vmatprep.subr.mxu0 0.0
  %646 = vmatpush2.xpose.msra.mxu0 0.0
  %647 = vmatprep.subr.mxu0 0.0
  %648 = vmatpush2.xpose.msra.mxu0 0.0
  %649 = vmatprep.subr.mxu0 0.0
  %650 = vmatpush2.xpose.msra.mxu0 0.0
  %651 = vmatprep.subr.mxu0 0.0
  %652 = vmatpush2.xpose.msra.mxu0 0.0
  %653 = vmatprep.mubr.f32.mxu0 0.0
  %654 = vmatmul.mubr.f32.gmra.mxu0 %v587
  %v655 = vpop.f32.mrf.mxu0
  %v656 = vadd.f32 %v582, %v655
  %v657 = vpop.f32.mrf.mxu0
  %658 = vdwg.mxu0
  %v659 = vtanh.pop %v656
  %660 = vst.msk [vmem:[%s4 + $0x8] sm:$0xff] %vm27, %v659
  // Predicated region
  $region18: #{time_rnn_forward.1} parent=0 // pred_check
    _
  $region19: #{time_rnn_forward.1} parent=0 // pred_check_branch
    %662 = sbr.rel (0) target = $region21
  $region20: #{time_rnn_forward.1} parent=0 // pred_region
    _
  $region21: #{time_rnn_forward.1} parent=0 // pred_fallthru
    _
  // Predicated region
  $region22: #{time_rnn_forward.1} parent=0 // pred_check
    _
  $region23: #{time_rnn_forward.1} parent=0 // pred_check_branch
    %664 = sbr.rel (0) target = $region25
  $region24: #{time_rnn_forward.1} parent=0 // pred_region
    _
  $region25: #{time_rnn_forward.1} parent=0 // pred_fallthru
    _

</llo_original>
